<compile_context>
chip_gen: v5e
topology: v5e:2x2
jax: 0.10.0
libtpu: 0.0.40
codegen_flags: <defaults>
</compile_context>

<pallas_src>
import jax
import jax.numpy as jnp
from jax.experimental import pallas as pl
from jax.experimental.pallas import tpu as pltpu

LANES = 128
SUBLANES = 8
_MAX_BLOCK_BYTES = 8 * 1024 * 1024   # never exceed 8 MiB per block
_MIN_BLOCK_BYTES = 2 * 1024 * 1024


def _round_up(v, m):
    return ((v + m - 1) // m) * m


def _vmem_capacity_bytes():
    """Physical VMEM capacity (per TensorCore); conservative fallback 64 MiB."""
    try:
        info = pltpu.get_tpu_info()
        cap = getattr(info, "vmem_capacity_bytes", None)
        if cap:
            return int(cap)
    except Exception:
        pass
    return 64 * 1024 * 1024


def _prelu_kernel(alpha_ref, x_ref, o_ref):
    # alpha_ref: SMEM scalar (shape (1,), f32); x_ref / o_ref: (tile_rows, 128) tile.
    x = x_ref[...]
    alpha = alpha_ref[0].astype(x.dtype)        # cast once per tile (native dtype math)
    o_ref[...] = jnp.where(x >= 0, x, alpha * x)


def _prelu_bulk(flat_aligned, alpha, donate_x=False):
    """Run the Pallas kernel on a flat, 128-multiple-length array."""
    n = flat_aligned.shape[0]
    dtype = flat_aligned.dtype
    itemsize = jnp.dtype(dtype).itemsize

    x2d = flat_aligned.reshape(-1, LANES)       # [rows, 128], lane-dense (free reshape)
    rows = x2d.shape[0]

    # Generation-aware block size: ~1/8 of physical VMEM, clamped to [2, 8] MiB.
    vmem_cap = _vmem_capacity_bytes()
    block_bytes = int(min(_MAX_BLOCK_BYTES, max(_MIN_BLOCK_BYTES, vmem_cap // 8)))
    # Double-buffered in + out = 4 * block; leave headroom under physical VMEM.
    vmem_limit = int(max(4 * block_bytes + (4 << 20),
                         min(vmem_cap - (8 << 20), 6 * block_bytes)))

    max_rows = max(SUBLANES, block_bytes // (LANES * itemsize))
    max_rows = (max_rows // SUBLANES) * SUBLANES

    # Ensure >= 2 grid steps when there is more than one sublane-tile of work,
    # so v7x's 2 TensorCores both get row blocks to chew on.
    if rows > SUBLANES:
        split_rows = _round_up(pl.cdiv(rows, 2), SUBLANES)
    else:
        split_rows = _round_up(rows, SUBLANES)
    tile_rows = min(max_rows, split_rows)
    grid = (pl.cdiv(rows, tile_rows),)          # partial last block masked by Pallas

    extra_kwargs = {}
    if donate_x:
        # Output reuses x2d's HBM buffer when the caller donates x.
        extra_kwargs["input_output_aliases"] = {1: 0}

    bytes_accessed = 2 * rows * LANES * itemsize   # one read + one write of the slab
    out2d = pl.pallas_call(
        _prelu_kernel,
        out_shape=jax.ShapeDtypeStruct((rows, LANES), dtype),
        grid_spec=pltpu.PrefetchScalarGridSpec(
            num_scalar_prefetch=0,
            grid=grid,
            in_specs=[
                pl.BlockSpec(memory_space=pltpu.MemorySpace.SMEM),    # alpha scalar
                pl.BlockSpec((tile_rows, LANES), lambda i: (i, 0)),   # x tile
            ],
            out_specs=pl.BlockSpec((tile_rows, LANES), lambda i: (i, 0)),
        ),
        compiler_params=pltpu.CompilerParams(
            dimension_semantics=("parallel",),   # v7x: shard row tiles across 2 TCs
            vmem_limit_bytes=vmem_limit,
        ),
        cost_estimate=pl.CostEstimate(
            flops=2 * rows * LANES,              # mul + select per element
            transcendentals=0,
            bytes_accessed=bytes_accessed,
        ),
        **extra_kwargs,
    )(alpha, x2d)

    return out2d.reshape(n)


def dgmrf_activation_forward(x, weight_param, donate_x=False):
    """Elementwise PReLU with alpha = softplus(weight_param).

    x: any shape (e.g. NCHW), floating dtype (kept native through the kernel).
    weight_param: shape (1,), float32.
    donate_x: if the caller donates x's buffer, alias it to the output (aligned path).
    """
    # Parameter glue (plain JAX): softplus of the scalar weight, kept in f32.
    alpha = jax.nn.softplus(weight_param).astype(jnp.float32)  # shape (1,)

    orig_shape = x.shape
    dtype = x.dtype

    flat = x.reshape(-1)                        # free metadata-only reshape
    n = flat.shape[0]
    rem = n % LANES

    if rem == 0:
        # Fast path: zero extra HBM passes (reshapes are free).
        out_flat = _prelu_bulk(flat, alpha, donate_x=donate_x)
    else:
        # Unaligned path: kernel on the 128-aligned bulk, tiny (<128 elem) tail
        # in plain JAX.  Avoids the old pad + slice full-tensor round-trips.
        n_bulk = n - rem
        tail = flat[n_bulk:]
        alpha_t = alpha[0].astype(dtype)
        tail_out = jnp.where(tail >= 0, tail, alpha_t * tail)
        if n_bulk == 0:
            out_flat = tail_out
        else:
            bulk_out = _prelu_bulk(flat[:n_bulk], alpha)
            out_flat = jnp.concatenate([bulk_out, tail_out])

    return out_flat.reshape(orig_shape)


# TODO(synk): the PyTorch module also caches `last_input` and exposes log_det();
# those are training-time bookkeeping, not part of the forward compute, and are
# intentionally not implemented in the kernel.


if __name__ == "__main__":
    key = jax.random.PRNGKey(0)
    k_w, k_x = jax.random.split(key)

    # weight_param ~ 2 * U[0,1) - 1, shape (1,)  (deterministic synthetic init)
    weight_param = 2.0 * jax.random.uniform(k_w, (1,), dtype=jnp.float32) - 1.0

    # Example input, NCHW
    x = jax.random.normal(k_x, (2, 4, 16, 16), dtype=jnp.float32)

    y = dgmrf_activation_forward(x, weight_param)
    y = jax.block_until_ready(y)

    # Reference check (plain JAX prelu)
    alpha = jax.nn.softplus(weight_param)[0]
    y_ref = jnp.where(x >= 0.0, x, alpha * x)
    assert y.shape == x.shape and y.dtype == x.dtype
    assert jnp.allclose(y, y_ref, atol=1e-6, rtol=1e-6)

    # Also exercise the unaligned (bulk + tail) path on a small odd-size tensor.
    x_odd = jax.random.normal(key, (5, 7, 13), dtype=jnp.float32)   # 455 elems
    y_odd = jax.block_until_ready(dgmrf_activation_forward(x_odd, weight_param))
    y_odd_ref = jnp.where(x_odd >= 0.0, x_odd, alpha * x_odd)
    assert jnp.allclose(y_odd, y_odd_ref, atol=1e-6, rtol=1e-6)

    print("KERNEL_OK")
</pallas_src>

<mosaic_0001>
module attributes {stable_mosaic.version = 11 : i64} {
  func.func @_prelu_kernel(%arg0: i32, %arg1: memref<1xf32, #tpu.memory_space<smem>>, %arg2: memref<8x128xf32, #tpu.memory_space<vmem>>, %arg3: memref<8x128xf32, #tpu.memory_space<vmem>>) attributes {dimension_semantics = [#tpu.dimension_semantics<parallel>], iteration_bounds = array<i64: 2>, scalar_prefetch = 0 : i64, scratch_operands = 0 : i64, tpu.core_type = #tpu.core_type<tc>, window_params = [{transform_indices = @transform_0, window_bounds = array<i64: 1>}, {transform_indices = @transform_1, window_bounds = array<i64: 8, 128>}, {transform_indices = @transform_2, window_bounds = array<i64: 8, 128>}]} {
    %c0 = arith.constant 0 : index
    %c0_0 = arith.constant 0 : index
    %0 = vector.load %arg2[%c0, %c0_0] : memref<8x128xf32, #tpu.memory_space<vmem>>, vector<8x128xf32>
    %c0_1 = arith.constant 0 : index
    %1 = memref.load %arg1[%c0_1] : memref<1xf32, #tpu.memory_space<smem>>
    %cst = arith.constant 0.000000e+00 : f32
    %2 = vector.broadcast %cst : f32 to vector<8x128xf32>
    %3 = arith.cmpf oge, %0, %2 : vector<8x128xf32>
    %4 = vector.broadcast %1 : f32 to vector<8x128xf32>
    %5 = arith.mulf %4, %0 : vector<8x128xf32>
    %6 = arith.select %3, %0, %5 : vector<8x128xi1>, vector<8x128xf32>
    %c0_2 = arith.constant 0 : index
    %c0_3 = arith.constant 0 : index
    %7 = vector.load %arg3[%c0_2, %c0_3] : memref<8x128xf32, #tpu.memory_space<vmem>>, vector<8x128xf32>
    tpu.vector_store %arg3[%c0_2, %c0_3], %6 {strides = array<i32>} : memref<8x128xf32, #tpu.memory_space<vmem>>, vector<8x128xf32>,
    return
  }
  func.func @transform_0(%arg0: i32) -> i32 {
    %c0_i32 = arith.constant 0 : i32
    %c0_i32_0 = arith.constant 0 : i32
    return %c0_i32 : i32
  }
  func.func @transform_1(%arg0: i32) -> (i32, i32) {
    %c0_i32 = arith.constant 0 : i32
    %c0_i32_0 = arith.constant 0 : i32
    return %arg0, %c0_i32 : i32, i32
  }
  func.func @transform_2(%arg0: i32) -> (i32, i32) {
    %c0_i32 = arith.constant 0 : i32
    %c0_i32_0 = arith.constant 0 : i32
    return %arg0, %c0_i32 : i32, i32
  }
}

</mosaic_0001>

<llo_original>
// kernel: tpu_custom_call.1
$region0: #{tpu_custom_call.1}
  #allocation0 [shape = 'u32[]', space=smem, size = 0x4, offset = 0x4, fixed_abs, tag = 'smem constant byte address 0x4 - core index']
  #allocation1 [shape = 'u32[72,128]{1,0:T(1,128)}', space=vmem, size = 0x9000, scoped, tag = 'internal scratch']
  #allocation2 [shape = 'f32[1]{0:T(128)S(6)}', space=smem, size = 0x200, scoped, tag = 'scoped memory for tpu_custom_call.1']
  %s0 = inlined_call_operand.<no memory space> [shape: f32[1], index: 0, kind: input, shape index: {}]
  %s1 = inlined_call_operand.hbm [shape: f32[16,128], index: 1, kind: input, shape index: {}]
  %s2 = inlined_call_operand.hbm [shape: f32[16,128], index: 2, kind: output, shape index: {}]
  %s3 = sld [smem:[#allocation0]]
  $region45: #{tpu_custom_call.1} parent=0
    _
  %s5 = ssub.s32 1, %s3
  %s6 = scalar_select 0, %s5, %s3
  %7 = sst [smem:[#allocation2]] %s0
  $region1: #{tpu_custom_call.1} parent=0
    #allocation3 [shape = 'u8[8192]{0}', space=vmem, size = 0x2000, scoped, tag = 'input window, operand 1']
    #allocation4 [shape = 's32[2]{0}', space=sflag, size = 0x8, scoped, tag = 'scoped memory for tpu_custom_call.1']
    #allocation5 [shape = 's32[2]{0}', space=sflag, size = 0x8, scoped, tag = 'scoped memory for tpu_custom_call.1']
    #allocation6 [shape = 'u8[8192]{0}', space=vmem, size = 0x2000, scoped, tag = 'output window, operand 0']
    %8 = vsyncpa [#allocation4], 0
    %s9 = scalar_lea.sflag [#allocation4], 1
    %10 = vsyncpa %s9, 0
    %11 = vsyncpa [#allocation5], 0
    %s12 = scalar_lea.sflag [#allocation5], 1
    %13 = vsyncpa %s12, 0
    loop: start=0, step=1, limit=4
    $region2: #{tpu_custom_call.1} parent=1 // loop_pre_header
      _
    $region3: #{tpu_custom_call.1} parent=1 // loop_header
      %s15 = sphi 0, %s19
      %p16 = scmp.ge.s32.totalorder %s15, 4
      %s23 = sphi 0, %s23
      %s25 = sphi 0, %s23
      %s26 = sphi 0, %s25
      %s40 = sphi 0, %s26
      %s46 = sphi 0, %s48
      %s49 = sphi 0, %s46
      %s50 = sphi 0, %s49
      %s66 = sphi 0, %s50
      %s72 = sphi 0, %s74
      %s75 = sphi 0, %s72
      %s76 = sphi 0, %s75
      %s92 = sphi 0, %s76
    $region4: #{tpu_custom_call.1} parent=1 // loop_header_branch
      %18 = sbr.rel (%p16) target = $region8
    $region5: #{tpu_custom_call.1} parent=1 // loop_body
      %s20 = ssub.s32 %s15, 1
      %s21 = ssub.s32 %s15, 2
      %s22 = sadd.s32 %s15, 1
      %s24 = sadd.s32 %s23, 1
      %p27 = scmp.eq.s32.totalorder %s15, 1
      %p28 = scmp.ne.s32.totalorder %s23, %s25
      %p29 = scmp.eq.s32.totalorder %s15, 0
      %p30 = por %p28, %p29
      %p31 = scmp.ne.s32.totalorder %s23, %s25
      %p32 = scmp.eq.s32.totalorder %s20, 1
      %p33 = por %p31, %p32
      %p34 = scmp.ne.s32.totalorder %s25, %s26
      %p35 = scmp.eq.s32.totalorder %s20, 0
      %p36 = por %p34, %p35
      %p37 = scmp.ne.s32.totalorder %s25, %s26
      %p38 = scmp.eq.s32.totalorder %s21, 1
      %p39 = por %p37, %p38
      %p41 = scmp.ne.s32.totalorder %s26, %s40
      %p42 = scmp.eq.s32.totalorder %s21, 0
      %p43 = por %p41, %p42
      %s44 = ssub.s32 %s15, %s22
      %p45 = scmp.eq.s32.totalorder %s44, 0
      %s47 = sadd.s32 %s46, 1
      %s48 = scalar_select %p45, %s46, %s47
      %p51 = pneg %p45
      %p52 = scmp.eq.s32.totalorder %s15, 1
      %p53 = por %p51, %p52
      %p54 = scmp.ne.s32.totalorder %s46, %s49
      %p55 = scmp.eq.s32.totalorder %s15, 0
      %p56 = por %p54, %p55
      %p57 = scmp.ne.s32.totalorder %s46, %s49
      %p58 = scmp.eq.s32.totalorder %s20, 1
      %p59 = por %p57, %p58
      %p60 = scmp.ne.s32.totalorder %s49, %s50
      %p61 = scmp.eq.s32.totalorder %s20, 0
      %p62 = por %p60, %p61
      %p63 = scmp.ne.s32.totalorder %s49, %s50
      %p64 = scmp.eq.s32.totalorder %s21, 1
      %p65 = por %p63, %p64
      %p67 = scmp.ne.s32.totalorder %s50, %s66
      %p68 = scmp.eq.s32.totalorder %s21, 0
      %p69 = por %p67, %p68
      %s70 = ssub.s32 %s15, %s22
      %p71 = scmp.eq.s32.totalorder %s70, 0
      %s73 = sadd.s32 %s72, 1
      %s74 = scalar_select %p71, %s72, %s73
      %p77 = pneg %p71
      %p78 = scmp.eq.s32.totalorder %s15, 1
      %p79 = por %p77, %p78
      %p80 = scmp.ne.s32.totalorder %s72, %s75
      %p81 = scmp.eq.s32.totalorder %s15, 0
      %p82 = por %p80, %p81
      %p83 = scmp.ne.s32.totalorder %s72, %s75
      %p84 = scmp.eq.s32.totalorder %s20, 1
      %p85 = por %p83, %p84
      %p86 = scmp.ne.s32.totalorder %s75, %s76
      %p87 = scmp.eq.s32.totalorder %s20, 0
      %p88 = por %p86, %p87
      %p89 = scmp.ne.s32.totalorder %s75, %s76
      %p90 = scmp.eq.s32.totalorder %s21, 1
      %p91 = por %p89, %p90
      %p93 = scmp.ne.s32.totalorder %s76, %s92
      %p94 = scmp.eq.s32.totalorder %s21, 0
      %p95 = por %p93, %p94
      %p96 = scmp.le.s32.totalorder 1, %s15
      %p97 = scmp.lt.s32.totalorder %s15, 3
      %p98 = pnand %p96, %p97
      %p99 = pneg %p98
      // Predicated region
      $region9: #{tpu_custom_call.1} parent=5 // pred_check
        _
      $region10: #{tpu_custom_call.1} parent=5 // pred_check_branch
        %101 = sbr.rel (%p98) target = $region12
      $region11: #{tpu_custom_call.1} parent=5 // pred_region
        %s102 = ssub.s32 %s15, 1
        // Predicated region
        $region13: #{tpu_custom_call.1} parent=11 // pred_check
          %p103 = pneg %p36
        $region14: #{tpu_custom_call.1} parent=11 // pred_check_branch
          %105 = sbr.rel (%p103) target = $region16
        $region15: #{tpu_custom_call.1} parent=11 // pred_region
          _
        $region16: #{tpu_custom_call.1} parent=11 // pred_fallthru
          _
      $region12: #{tpu_custom_call.1} parent=5 // pred_fallthru
        _
      %p106 = scmp.lt.s32.totalorder %s15, 2
      // Predicated region
      $region17: #{tpu_custom_call.1} parent=5 // pred_check
        %p107 = pneg %p106
      $region18: #{tpu_custom_call.1} parent=5 // pred_check_branch
        %109 = sbr.rel (%p107) target = $region20
      $region19: #{tpu_custom_call.1} parent=5 // pred_region
        // Predicated region
        $region21: #{tpu_custom_call.1} parent=19 // pred_check
          %p110 = pneg %p56
        $region22: #{tpu_custom_call.1} parent=19 // pred_check_branch
          %112 = sbr.rel (%p110) target = $region24
        $region23: #{tpu_custom_call.1} parent=19 // pred_region
          %s113 = sand.u32 %s46, 1
          %s114 = scalar_lea.sflag [#allocation4], %s113
          %s115 = sand.u32 %s46, 1
          %s116 = smul.addr %s115, 8
          %s117 = scalar_lea.vmem [#allocation3], %s116
          %119 = vsyncadd %s114, 0
          %s120 = smul.addr %s15, 8
          %s121 = scalar_lea.hbm %s1, %s120
          %s123 = sshll.u32 %s121, 4
          %s124 = int_to_ptr.hbm [resolvable:$true] %s123
          %s125 = sshll.u32 %s117, 4
          %s126 = int_to_ptr.vmem [resolvable:$true] %s125
          %128 = dma.hbm_to_vmem [thread:$0]  %s124, 128, %s126, %s114
        $region24: #{tpu_custom_call.1} parent=19 // pred_fallthru
          _
      $region20: #{tpu_custom_call.1} parent=5 // pred_fallthru
        _
      %p129 = scmp.le.s32.totalorder 1, %s15
      %p130 = scmp.lt.s32.totalorder %s15, 3
      %p131 = pnand %p129, %p130
      %p132 = pneg %p131
      // Predicated region
      $region25: #{tpu_custom_call.1} parent=5 // pred_check
        _
      $region26: #{tpu_custom_call.1} parent=5 // pred_check_branch
        %134 = sbr.rel (%p131) target = $region28
      $region27: #{tpu_custom_call.1} parent=5 // pred_region
        %s135 = ssub.s32 %s15, 1
        %s136 = sand.u32 %s49, 1
        %s137 = scalar_lea.sflag [#allocation4], %s136
        %s138 = sand.u32 %s49, 1
        %s139 = smul.addr %s138, 8
        %s140 = scalar_lea.vmem [#allocation3], %s139
        // Predicated region
        $region29: #{tpu_custom_call.1} parent=27 // pred_check
          %p141 = pneg %p62
        $region30: #{tpu_custom_call.1} parent=27 // pred_check_branch
          %143 = sbr.rel (%p141) target = $region32
        $region31: #{tpu_custom_call.1} parent=27 // pred_region
          %145 = dma.done %s137, 128
        $region32: #{tpu_custom_call.1} parent=27 // pred_fallthru
          _
        %p146 = pneg %p36
        %p147 = pneg %p33
        %s148 = sand.u32 %s49, 1
        %s149 = scalar_lea.sflag [#allocation4], %s148
        %s150 = sand.u32 %s49, 1
        %s151 = smul.addr %s150, 8
        %s152 = scalar_lea.vmem [#allocation3], %s151
        %p153 = pneg %p62
        %p154 = pneg %p59
        %p155 = pneg %p88
        %p156 = pneg %p85
        %s157 = sand.u32 %s75, 1
        %s158 = scalar_lea.sflag [#allocation5], %s157
        %s159 = sand.u32 %s75, 1
        %s160 = smul.addr %s159, 8
        %s161 = scalar_lea.vmem [#allocation6], %s160
        %v162 = vld [vmem:[%s140] sm:$0xff]
        %s163 = sld [smem:[#allocation2]]
        %vm164 = vcmp.ge.f32.partialorder %v162, 0.0
        %v165 = vstv %s163
        %v166 = vmul.f32 %v165, %v162
        %v167 = vsel %vm164, %v162, %v166
        %168 = vst [vmem:[%s161] sm:$0xff] %v167
        %s169 = sand.u32 %s75, 1
        %s170 = scalar_lea.sflag [#allocation5], %s169
        %s171 = sand.u32 %s75, 1
        %s172 = smul.addr %s171, 8
        %s173 = scalar_lea.vmem [#allocation6], %s172
        // Predicated region
        $region33: #{tpu_custom_call.1} parent=27 // pred_check
          %p174 = pneg %p85
        $region34: #{tpu_custom_call.1} parent=27 // pred_check_branch
          %176 = sbr.rel (%p174) target = $region36
        $region35: #{tpu_custom_call.1} parent=27 // pred_region
          %178 = vsyncadd %s170, 0
          %s179 = smul.addr %s20, 8
          %s180 = scalar_lea.hbm %s2, %s179
          %s182 = sshll.u32 %s173, 4
          %s183 = int_to_ptr.vmem [resolvable:$true] %s182
          %s184 = sshll.u32 %s180, 4
          %s185 = int_to_ptr.hbm [resolvable:$true] %s184
          %187 = dma.vmem_to_hbm [thread:$0]  %s183, 128, %s185, %s170
        $region36: #{tpu_custom_call.1} parent=27 // pred_fallthru
          _
      $region28: #{tpu_custom_call.1} parent=5 // pred_fallthru
        _
      %p188 = scmp.le.s32.totalorder 2, %s15
      // Predicated region
      $region37: #{tpu_custom_call.1} parent=5 // pred_check
        %p189 = pneg %p188
      $region38: #{tpu_custom_call.1} parent=5 // pred_check_branch
        %191 = sbr.rel (%p189) target = $region40
      $region39: #{tpu_custom_call.1} parent=5 // pred_region
        %s192 = ssub.s32 %s15, 2
        // Predicated region
        $region41: #{tpu_custom_call.1} parent=39 // pred_check
          %p193 = pneg %p91
        $region42: #{tpu_custom_call.1} parent=39 // pred_check_branch
          %195 = sbr.rel (%p193) target = $region44
        $region43: #{tpu_custom_call.1} parent=39 // pred_region
          %s196 = sand.u32 %s76, 1
          %s197 = scalar_lea.sflag [#allocation5], %s196
          %s198 = sand.u32 %s76, 1
          %s199 = smul.addr %s198, 8
          %s200 = scalar_lea.vmem [#allocation6], %s199
          %202 = dma.done %s197, 128
        $region44: #{tpu_custom_call.1} parent=39 // pred_fallthru
          _
      $region40: #{tpu_custom_call.1} parent=5 // pred_fallthru
        _
    $region6: #{tpu_custom_call.1} parent=1 // loop_footer
      %s19 = sadd.s32 1, %s15
    $region7: #{tpu_custom_call.1} parent=1 // loop_footer_branch
      %14 = sbr.rel target = $region3
    $region8: #{tpu_custom_call.1} parent=1 // loop_exit
      _
    %203 = vsyncpa [#allocation4], 1
    %s204 = scalar_lea.sflag [#allocation4], 1
    %205 = vsyncpa %s204, 1
    %206 = vsyncpa [#allocation5], 1
    %s207 = scalar_lea.sflag [#allocation5], 1
    %208 = vsyncpa %s207, 1

</llo_original>
